<compile_context>
chip_gen: v7x
topology: tpu7x:2x2x1
jax: 0.10.0
libtpu: 0.0.40
codegen_flags: <defaults>
</compile_context>

<pallas_src>
import functools

import jax
import jax.numpy as jnp
from jax.experimental import pallas as pl
from jax.experimental.pallas import tpu as pltpu

EPS = 1e-5

# Per-pipelined-buffer VMEM budget (f32 working set). ~1 MiB keeps
# 2 in-bufs + 2 out-bufs + f32 temporaries well under the default scoped-VMEM
# limit on every generation while staying past the ~512-lane point where the
# HBM roofline saturates.
_TARGET_BLOCK_BYTES = 1 << 20

# Below this total size, pallas_call launch / per-grid-step overhead dominates;
# plain fused XLA is strictly faster.
_SMALL_INPUT_BYTES = 1 << 20


def _fast_inv(a):
    """1/a: EUP approximate reciprocal + one Newton-Raphson refinement."""
    r = pl.reciprocal(a, approx=True)
    return r * (jnp.float32(2.0) - a * r)


# ----------------------------------------------------------------------------
# One-pass kernel: whole batch resident, feature axis tiled (lane-dense).
# ----------------------------------------------------------------------------
def _onepass_kernel(x_ref, o_ref, *, eps):
    B = x_ref.shape[0]
    # Compute the mean first, then re-read the VMEM ref so only `d` stays live
    # as a full-tile f32 temporary (cuts intermediate footprint ~in half).
    m = jnp.mean(x_ref[...].astype(jnp.float32), axis=0, keepdims=True)
    d = x_ref[...].astype(jnp.float32) - m                      # (B, TILE_F)
    if B > 1:
        var = jnp.sum(d * d, axis=0, keepdims=True) * jnp.float32(1.0 / (B - 1))
    else:
        var = m * m
    inv = _fast_inv(jnp.sqrt(var) + jnp.float32(eps))           # (1, TILE_F)
    o_ref[...] = (d * inv).astype(o_ref.dtype)


def _choose_tile_f(B, F, target_bytes=_TARGET_BLOCK_BYTES):
    """Lane-dense tile width (multiple of 128) for the feature axis."""
    n128 = pl.cdiv(F, 128)
    if n128 <= 1:
        return F                       # single block; block dim == array dim
    # VMEM budget for one (B, tile_f) f32 working block.
    cap = max(1, target_bytes // (4 * B * 128))
    # Keep >=4 grid steps (>=2 for small F) so the DMA pipeline overlaps and
    # v7x can shard the parallel feature axis across both TensorCores.
    if n128 >= 8:
        cap = min(cap, n128 // 4)
    else:
        cap = min(cap, max(1, n128 // 2))
    return 128 * max(1, min(cap, n128))


def _one_pass(x2, B, F, eps):
    tile_f = _choose_tile_f(B, F)
    itemsize = jnp.dtype(x2.dtype).itemsize
    return pl.pallas_call(
        functools.partial(_onepass_kernel, eps=eps),
        out_shape=jax.ShapeDtypeStruct((B, F), x2.dtype),
        grid_spec=pltpu.PrefetchScalarGridSpec(
            num_scalar_prefetch=0,
            grid=(pl.cdiv(F, tile_f),),
            in_specs=[pl.BlockSpec((B, tile_f), lambda j: (0, j))],
            out_specs=pl.BlockSpec((B, tile_f), lambda j: (0, j)),
        ),
        compiler_params=pltpu.CompilerParams(
            dimension_semantics=("parallel",)),
        cost_estimate=pl.CostEstimate(
            flops=5 * B * F, transcendentals=F,
            bytes_accessed=2 * B * F * itemsize),
    )(x2)


# ----------------------------------------------------------------------------
# Two-pass path for large batches: batch-tiled stats accumulation + whitening.
# ----------------------------------------------------------------------------
def _stats_kernel(x_ref, mean_ref, inv_ref, acc_s, acc_q, *,
                  valid_b, tile_b, eps):
    bi = pl.program_id(1)                         # reduction axis (last, "arbitrary")

    @pl.when(bi == 0)
    def _():
        acc_s[...] = jnp.zeros_like(acc_s)
        acc_q[...] = jnp.zeros_like(acc_q)

    xf = x_ref[...].astype(jnp.float32)
    if valid_b % tile_b != 0:                     # mask the ragged batch tail
        row = jax.lax.broadcasted_iota(jnp.int32, xf.shape, 0) + bi * tile_b
        xf = jnp.where(row < valid_b, xf, jnp.float32(0.0))
    acc_s[...] += jnp.sum(xf, axis=0, keepdims=True)
    acc_q[...] += jnp.sum(xf * xf, axis=0, keepdims=True)

    @pl.when(bi == pl.num_programs(1) - 1)
    def _():
        n = jnp.float32(valid_b)
        m = acc_s[...] / n
        ss = jnp.maximum(acc_q[...] - n * m * m, jnp.float32(0.0))
        if valid_b > 1:
            var = ss * jnp.float32(1.0 / (valid_b - 1))
        else:
            var = m * m
        mean_ref[...] = m
        inv_ref[...] = _fast_inv(jnp.sqrt(var) + jnp.float32(eps))


def _whiten_kernel(x_ref, mean_ref, inv_ref, o_ref):
    xf = x_ref[...].astype(jnp.float32)
    o_ref[...] = ((xf - mean_ref[...]) * inv_ref[...]).astype(o_ref.dtype)


def _choose_two_pass_tiles(B, F, target_bytes=_TARGET_BLOCK_BYTES):
    n128 = pl.cdiv(F, 128)
    tile_f = F if n128 <= 1 else 128 * min(n128, 4)   # up to 512 lanes
    if B < 8:
        return B, tile_f                              # block dim == array dim
    cap_rows = max(8, (target_bytes // (4 * tile_f)) // 8 * 8)
    b_full = (B // 8) * 8
    tile_b = max(8, min(cap_rows, b_full))
    return tile_b, tile_f


def _two_pass(x2, B, F, eps):
    tile_b, tile_f = _choose_two_pass_tiles(B, F)
    n_f = pl.cdiv(F, tile_f)
    n_b = pl.cdiv(B, tile_b)
    itemsize = jnp.dtype(x2.dtype).itemsize

    mean, inv = pl.pallas_call(
        functools.partial(_stats_kernel, valid_b=B, tile_b=tile_b, eps=eps),
        out_shape=(jax.ShapeDtypeStruct((1, F), jnp.float32),
                   jax.ShapeDtypeStruct((1, F), jnp.float32)),
        grid_spec=pltpu.PrefetchScalarGridSpec(
            num_scalar_prefetch=0,
            grid=(n_f, n_b),                      # reduction axis last
            in_specs=[pl.BlockSpec((tile_b, tile_f), lambda j, i: (i, j))],
            out_specs=[pl.BlockSpec((1, tile_f), lambda j, i: (0, j)),
                       pl.BlockSpec((1, tile_f), lambda j, i: (0, j))],
            scratch_shapes=[pltpu.VMEM((1, tile_f), jnp.float32),
                            pltpu.VMEM((1, tile_f), jnp.float32)],
        ),
        compiler_params=pltpu.CompilerParams(
            dimension_semantics=("parallel", "arbitrary")),
        cost_estimate=pl.CostEstimate(
            flops=3 * B * F, transcendentals=F,
            bytes_accessed=B * F * itemsize),
    )(x2)

    out = pl.pallas_call(
        _whiten_kernel,
        out_shape=jax.ShapeDtypeStruct((B, F), x2.dtype),
        grid_spec=pltpu.PrefetchScalarGridSpec(
            num_scalar_prefetch=0,
            grid=(n_f, n_b),
            in_specs=[pl.BlockSpec((tile_b, tile_f), lambda j, i: (i, j)),
                      pl.BlockSpec((1, tile_f), lambda j, i: (0, j)),
                      pl.BlockSpec((1, tile_f), lambda j, i: (0, j))],
            out_specs=pl.BlockSpec((tile_b, tile_f), lambda j, i: (i, j)),
        ),
        compiler_params=pltpu.CompilerParams(
            dimension_semantics=("parallel", "parallel")),
        cost_estimate=pl.CostEstimate(
            flops=2 * B * F, transcendentals=0,
            bytes_accessed=2 * B * F * itemsize),
    )(x2, mean, inv)
    return out


# ----------------------------------------------------------------------------
# Wrapper
# ----------------------------------------------------------------------------
def _jnp_forward(x2, eps):
    """Fused-XLA fast path for tiny inputs (launch overhead dominates)."""
    B = x2.shape[0]
    xf = x2.astype(jnp.float32)
    m = jnp.mean(xf, axis=0, keepdims=True)
    d = xf - m
    var = (jnp.sum(d * d, axis=0, keepdims=True) / (B - 1)) if B > 1 else m * m
    return (d / (jnp.sqrt(var) + eps)).astype(x2.dtype)


def mean_std_filter(x, eps=EPS, *, force_pallas=False, two_pass=None):
    """x: (B, *input_shape) -> whitened array of the same shape/dtype.

    Matches MeanStdFilter.forward on a fresh module in training mode.
    """
    # TODO(synk): persistent running-state updates (_M/_S/_n nn.Parameters
    # carried across calls) have no in-kernel equivalent; thread them
    # functionally if multi-call semantics are needed.
    B = int(x.shape[0])
    F = 1
    for d in x.shape[1:]:
        F *= int(d)
    x2 = x.reshape(B, F)

    itemsize = jnp.dtype(x.dtype).itemsize
    if (B * F * itemsize < _SMALL_INPUT_BYTES) and not force_pallas:
        return _jnp_forward(x2, eps).reshape(x.shape)

    if two_pass is None:
        # A resident (B, 128) f32 strip must fit the per-buffer budget,
        # otherwise tile the batch axis too.
        two_pass = B * 128 * 4 > _TARGET_BLOCK_BYTES

    out2 = _two_pass(x2, B, F, eps) if two_pass else _one_pass(x2, B, F, eps)
    return out2.reshape(x.shape)


# ----------------------------------------------------------------------------
# Reference (sequential Welford, exactly the PyTorch forward)
# ----------------------------------------------------------------------------
def _reference(x, eps=EPS):
    B = x.shape[0]
    xf = x.reshape(B, -1).astype(jnp.float32)
    M = jnp.zeros(xf.shape[1], jnp.float32)
    S = jnp.zeros(xf.shape[1], jnp.float32)
    for i in range(B):
        n = i + 1
        delta = xf[i] - M
        M = M + delta / n
        S = S + delta * delta * (i / n)
    var = S / (B - 1) if B > 1 else M * M
    std = jnp.sqrt(var)
    out = (xf - M[None, :]) / (std[None, :] + eps)
    return out.reshape(x.shape).astype(x.dtype)


if __name__ == "__main__":
    key = jax.random.PRNGKey(0)
    k0, k1, k2 = jax.random.split(key, 3)

    # input_shape = (4, 16, 16), batch = 2  -> x: (2, 4, 16, 16)
    x = jax.random.normal(k0, (2, 4, 16, 16), dtype=jnp.float32)
    y = mean_std_filter(x, force_pallas=True)        # exercise the Pallas kernel
    jax.block_until_ready(y)
    y_ref = _reference(x)
    assert y.shape == x.shape
    assert jnp.allclose(y, y_ref, atol=1e-4, rtol=1e-4), "pallas vs reference"

    # Small-input fast path (plain jnp) must agree.
    y_fast = mean_std_filter(x)
    assert jnp.allclose(y_fast, y_ref, atol=1e-4, rtol=1e-4), "fastpath mismatch"

    # Ragged feature count (F = 300, not a multiple of 128): no pad/slice,
    # relies on Pallas boundary masking of the last feature block.
    x3 = jax.random.normal(k1, (2, 3, 10, 10), dtype=jnp.float32)
    y3 = mean_std_filter(x3, force_pallas=True)
    assert jnp.allclose(y3, _reference(x3), atol=1e-4, rtol=1e-4), "ragged mismatch"

    # Batch-tiled two-pass path (auto-selected for very large B); B = 20 also
    # exercises the ragged batch-tail masking in the stats kernel.
    x4 = jax.random.normal(k2, (20, 6, 64), dtype=jnp.float32)
    y4 = mean_std_filter(x4, force_pallas=True, two_pass=True)
    assert jnp.allclose(y4, _reference(x4), atol=1e-4, rtol=1e-4), "two-pass mismatch"

    jax.block_until_ready((y3, y4))
    print("KERNEL_OK")
</pallas_src>

<mosaic_0001>
module attributes {stable_mosaic.version = 11 : i64} {
  func.func @_onepass_kernel(%arg0: i32, %arg1: memref<2x256xf32, #tpu.memory_space<vmem>>, %arg2: memref<2x256xf32, #tpu.memory_space<vmem>>) attributes {dimension_semantics = [#tpu.dimension_semantics<parallel>], iteration_bounds = array<i64: 4>, scalar_prefetch = 0 : i64, scratch_operands = 0 : i64, tpu.core_type = #tpu.core_type<tc>, window_params = [{transform_indices = @transform_0, window_bounds = array<i64: 2, 256>}, {transform_indices = @transform_1, window_bounds = array<i64: 2, 256>}]} {
    %c0 = arith.constant 0 : index
    %c0_0 = arith.constant 0 : index
    %0 = vector.load %arg1[%c0, %c0_0] : memref<2x256xf32, #tpu.memory_space<vmem>>, vector<2x256xf32>
    %cst = arith.constant dense<0.000000e+00> : vector<256xf32>
    %1 = vector.multi_reduction <add>, %0, %cst [0] : vector<2x256xf32> to vector<256xf32>
    %2 = vector.shape_cast %1 : vector<256xf32> to vector<1x256xf32>
    %cst_1 = arith.constant 2.000000e+00 : f32
    %3 = vector.broadcast %cst_1 : f32 to vector<1x256xf32>
    %4 = arith.divf %2, %3 : vector<1x256xf32>
    %c0_2 = arith.constant 0 : index
    %c0_3 = arith.constant 0 : index
    %5 = vector.load %arg1[%c0_2, %c0_3] : memref<2x256xf32, #tpu.memory_space<vmem>>, vector<2x256xf32>
    %6 = vector.broadcast %4 : vector<1x256xf32> to vector<2x256xf32>
    %7 = arith.subf %5, %6 : vector<2x256xf32>
    %8 = arith.mulf %7, %7 : vector<2x256xf32>
    %cst_4 = arith.constant dense<0.000000e+00> : vector<256xf32>
    %9 = vector.multi_reduction <add>, %8, %cst_4 [0] : vector<2x256xf32> to vector<256xf32>
    %10 = vector.shape_cast %9 : vector<256xf32> to vector<1x256xf32>
    %cst_5 = arith.constant 1.000000e+00 : f32
    %11 = vector.broadcast %cst_5 : f32 to vector<1x256xf32>
    %12 = arith.mulf %10, %11 : vector<1x256xf32>
    %13 = math.sqrt %12 : vector<1x256xf32>
    %cst_6 = arith.constant 9.99999974E-6 : f32
    %14 = vector.broadcast %cst_6 : f32 to vector<1x256xf32>
    %15 = arith.addf %13, %14 : vector<1x256xf32>
    %16 = tpu.reciprocal %15 {approx = true} : vector<1x256xf32> -> vector<1x256xf32>
    %17 = arith.mulf %15, %16 : vector<1x256xf32>
    %cst_7 = arith.constant 2.000000e+00 : f32
    %18 = vector.broadcast %cst_7 : f32 to vector<1x256xf32>
    %19 = arith.subf %18, %17 : vector<1x256xf32>
    %20 = arith.mulf %16, %19 : vector<1x256xf32>
    %21 = vector.broadcast %20 : vector<1x256xf32> to vector<2x256xf32>
    %22 = arith.mulf %7, %21 : vector<2x256xf32>
    %c0_8 = arith.constant 0 : index
    %c0_9 = arith.constant 0 : index
    %23 = vector.load %arg2[%c0_8, %c0_9] : memref<2x256xf32, #tpu.memory_space<vmem>>, vector<2x256xf32>
    tpu.vector_store %arg2[%c0_8, %c0_9], %22 {strides = array<i32>} : memref<2x256xf32, #tpu.memory_space<vmem>>, vector<2x256xf32>,
    return
  }
  func.func @transform_0(%arg0: i32) -> (i32, i32) {
    %c0_i32 = arith.constant 0 : i32
    %c0_i32_0 = arith.constant 0 : i32
    return %c0_i32, %arg0 : i32, i32
  }
  func.func @transform_1(%arg0: i32) -> (i32, i32) {
    %c0_i32 = arith.constant 0 : i32
    %c0_i32_0 = arith.constant 0 : i32
    return %c0_i32, %arg0 : i32, i32
  }
}

</mosaic_0001>

<llo_original>
// kernel: tpu_custom_call.1
$region0: #{tpu_custom_call.1}
  #allocation0 [shape = 'u32[]', space=smem, size = 0x4, offset = 0x4, fixed_abs, tag = 'smem constant byte address 0x4 - core index']
  #allocation1 [shape = 'u32[144,128]{1,0:T(1,128)}', space=vmem, size = 0x12000, scoped, tag = 'internal scratch']
  %s0 = inlined_call_operand.hbm [shape: f32[2,1024], index: 0, kind: input, shape index: {}]
  %s1 = inlined_call_operand.hbm [shape: f32[2,1024], index: 1, kind: output, shape index: {}]
  %s2 = sld [smem:[#allocation0]]
  $region41: #{tpu_custom_call.1} parent=0
    _
  %s4 = ssub.s32 1, %s2
  %s5 = scalar_select 0, %s4, %s2
  $region1: #{tpu_custom_call.1} parent=0
    #allocation2 [shape = 'u8[4096]{0}', space=vmem, size = 0x1000, scoped, tag = 'input window, operand 0']
    #allocation3 [shape = 's32[2]{0}', space=sflag, size = 0x8, scoped, tag = 'scoped memory for tpu_custom_call.1']
    #allocation4 [shape = 's32[2]{0}', space=sflag, size = 0x8, scoped, tag = 'scoped memory for tpu_custom_call.1']
    #allocation5 [shape = 'u8[4096]{0}', space=vmem, size = 0x1000, scoped, tag = 'output window, operand 0']
    %6 = vsyncpa [#allocation3], 0
    %s7 = scalar_lea.sflag [#allocation3], 1
    %8 = vsyncpa %s7, 0
    %9 = vsyncpa [#allocation4], 0
    %s10 = scalar_lea.sflag [#allocation4], 1
    %11 = vsyncpa %s10, 0
    loop: start=0, step=1, limit=6
    $region2: #{tpu_custom_call.1} parent=1 // loop_pre_header
      _
    $region3: #{tpu_custom_call.1} parent=1 // loop_header
      %s13 = sphi 0, %s17
      %p14 = scmp.ge.s32.totalorder %s13, 6
      %s23 = sphi 0, %s25
      %s26 = sphi 0, %s23
      %s27 = sphi 0, %s26
      %s43 = sphi 0, %s27
      %s49 = sphi 0, %s51
      %s52 = sphi 0, %s49
      %s53 = sphi 0, %s52
      %s69 = sphi 0, %s53
    $region4: #{tpu_custom_call.1} parent=1 // loop_header_branch
      %16 = sbr.rel (%p14) target = $region8
    $region5: #{tpu_custom_call.1} parent=1 // loop_body
      %s18 = ssub.s32 %s13, 1
      %s19 = ssub.s32 %s13, 2
      %s20 = sadd.s32 %s13, 1
      %s21 = ssub.s32 %s13, %s20
      %p22 = scmp.eq.s32.totalorder %s21, 0
      %s24 = sadd.s32 %s23, 1
      %s25 = scalar_select %p22, %s23, %s24
      %p28 = pneg %p22
      %p29 = scmp.eq.s32.totalorder %s13, 3
      %p30 = por %p28, %p29
      %p31 = scmp.ne.s32.totalorder %s23, %s26
      %p32 = scmp.eq.s32.totalorder %s13, 0
      %p33 = por %p31, %p32
      %p34 = scmp.ne.s32.totalorder %s23, %s26
      %p35 = scmp.eq.s32.totalorder %s18, 3
      %p36 = por %p34, %p35
      %p37 = scmp.ne.s32.totalorder %s26, %s27
      %p38 = scmp.eq.s32.totalorder %s18, 0
      %p39 = por %p37, %p38
      %p40 = scmp.ne.s32.totalorder %s26, %s27
      %p41 = scmp.eq.s32.totalorder %s19, 3
      %p42 = por %p40, %p41
      %p44 = scmp.ne.s32.totalorder %s27, %s43
      %p45 = scmp.eq.s32.totalorder %s19, 0
      %p46 = por %p44, %p45
      %s47 = ssub.s32 %s13, %s20
      %p48 = scmp.eq.s32.totalorder %s47, 0
      %s50 = sadd.s32 %s49, 1
      %s51 = scalar_select %p48, %s49, %s50
      %p54 = pneg %p48
      %p55 = scmp.eq.s32.totalorder %s13, 3
      %p56 = por %p54, %p55
      %p57 = scmp.ne.s32.totalorder %s49, %s52
      %p58 = scmp.eq.s32.totalorder %s13, 0
      %p59 = por %p57, %p58
      %p60 = scmp.ne.s32.totalorder %s49, %s52
      %p61 = scmp.eq.s32.totalorder %s18, 3
      %p62 = por %p60, %p61
      %p63 = scmp.ne.s32.totalorder %s52, %s53
      %p64 = scmp.eq.s32.totalorder %s18, 0
      %p65 = por %p63, %p64
      %p66 = scmp.ne.s32.totalorder %s52, %s53
      %p67 = scmp.eq.s32.totalorder %s19, 3
      %p68 = por %p66, %p67
      %p70 = scmp.ne.s32.totalorder %s53, %s69
      %p71 = scmp.eq.s32.totalorder %s19, 0
      %p72 = por %p70, %p71
      %p73 = scmp.le.s32.totalorder 1, %s13
      %p74 = scmp.lt.s32.totalorder %s13, 5
      %p75 = pnand %p73, %p74
      %p76 = pneg %p75
      // Predicated region
      $region9: #{tpu_custom_call.1} parent=5 // pred_check
        _
      $region10: #{tpu_custom_call.1} parent=5 // pred_check_branch
        %78 = sbr.rel (%p75) target = $region12
      $region11: #{tpu_custom_call.1} parent=5 // pred_region
        %s79 = ssub.s32 %s13, 1
      $region12: #{tpu_custom_call.1} parent=5 // pred_fallthru
        _
      %p80 = scmp.lt.s32.totalorder %s13, 4
      // Predicated region
      $region13: #{tpu_custom_call.1} parent=5 // pred_check
        %p81 = pneg %p80
      $region14: #{tpu_custom_call.1} parent=5 // pred_check_branch
        %83 = sbr.rel (%p81) target = $region16
      $region15: #{tpu_custom_call.1} parent=5 // pred_region
        // Predicated region
        $region17: #{tpu_custom_call.1} parent=15 // pred_check
          %p84 = pneg %p33
        $region18: #{tpu_custom_call.1} parent=15 // pred_check_branch
          %86 = sbr.rel (%p84) target = $region20
        $region19: #{tpu_custom_call.1} parent=15 // pred_region
          %s87 = sand.u32 %s23, 1
          %s88 = scalar_lea.sflag [#allocation3], %s87
          %s89 = sand.u32 %s23, 1
          %s90 = smul.addr %s89, 4
          %s91 = scalar_lea.vmem [#allocation2], %s90
          %s92 = smul.u32 2, %s13
          %s94 = ssub.s32 64, 64
          %95 = vsyncadd %s88, %s94
          %s96 = smul.addr %s92, 32
          %s97 = scalar_lea.hbm %s0, %s96
          %s99 = sshll.u32 %s91, 4
          %s100 = int_to_ptr.vmem [resolvable:$true] %s99
          %102 = dma.hbm_to_vmem [thread:$0]  %s97, 64, %s100, %s88
        $region20: #{tpu_custom_call.1} parent=15 // pred_fallthru
          _
      $region16: #{tpu_custom_call.1} parent=5 // pred_fallthru
        _
      %p103 = scmp.le.s32.totalorder 1, %s13
      %p104 = scmp.lt.s32.totalorder %s13, 5
      %p105 = pnand %p103, %p104
      %p106 = pneg %p105
      // Predicated region
      $region21: #{tpu_custom_call.1} parent=5 // pred_check
        _
      $region22: #{tpu_custom_call.1} parent=5 // pred_check_branch
        %108 = sbr.rel (%p105) target = $region24
      $region23: #{tpu_custom_call.1} parent=5 // pred_region
        %s109 = ssub.s32 %s13, 1
        %s110 = sand.u32 %s26, 1
        %s111 = scalar_lea.sflag [#allocation3], %s110
        %s112 = sand.u32 %s26, 1
        %s113 = smul.addr %s112, 4
        %s114 = scalar_lea.vmem [#allocation2], %s113
        // Predicated region
        $region25: #{tpu_custom_call.1} parent=23 // pred_check
          %p115 = pneg %p39
        $region26: #{tpu_custom_call.1} parent=23 // pred_check_branch
          %117 = sbr.rel (%p115) target = $region28
        $region27: #{tpu_custom_call.1} parent=23 // pred_region
          %118 = dma.done %s111, 64
        $region28: #{tpu_custom_call.1} parent=23 // pred_fallthru
          _
        %s119 = sand.u32 %s26, 1
        %s120 = scalar_lea.sflag [#allocation3], %s119
        %s121 = sand.u32 %s26, 1
        %s122 = smul.addr %s121, 4
        %s123 = scalar_lea.vmem [#allocation2], %s122
        %p124 = pneg %p39
        %p125 = pneg %p36
        %p126 = pneg %p65
        %p127 = pneg %p62
        %s128 = sand.u32 %s52, 1
        %s129 = scalar_lea.sflag [#allocation4], %s128
        %s130 = sand.u32 %s52, 1
        %s131 = smul.addr %s130, 4
        %s132 = scalar_lea.vmem [#allocation5], %s131
        %s133 = smul.u32 2, %s18
        %s134 = smul.u32 2, %s18
        %v135 = vld [vmem:[%s114] sm:$0xf]
        %v138 = vunpack.c.l.s4 1983009808
        %v139 = vunpack.c.0.s8 %v138
        %v140 = vlaneseq
        %v141 = vshrl.u32 %v140, 7
        %v142 = vsub.s32 %v139, %v141
        %v143 = vrot.slane %v135, %v142
        %v144 = vcombine.high %v143, %v143
        %vm147 = vcmask 1041408
        %v148 = vsel %vm147, %v143, 0.0
        %v149 = vrot.slane %v148, 4
        %v150 = vadd.f32 %v148, %v149
        %v151 = vrot.slane %v150, 2
        %v152 = vadd.f32 %v150, %v151
        %v153 = vrot.slane %v152, 1
        %v154 = vadd.f32 %v152, %v153
        %v155 = vsel %vm147, %v144, 0.0
        %v156 = vrot.slane %v155, 4
        %v157 = vadd.f32 %v155, %v156
        %v158 = vrot.slane %v157, 2
        %v159 = vadd.f32 %v157, %v158
        %v160 = vrot.slane %v159, 1
        %v161 = vadd.f32 %v159, %v160
        %v162 = vrcp.pop 2.0
        %v163 = vmul.f32 %v154, %v162
        %v164 = vmul.f32 %v161, %v162
        %v167 = vcombine.low %v163, %v164
        %v169 = vunpack.c.l.s4 1983009808
        %v170 = vunpack.c.0.s8 %v169
        %v171 = vlaneseq
        %v172 = vshrl.u32 %v171, 7
        %v173 = vsub.s32 %v170, %v172
        %v174 = vrot.slane %v167, %v173
        %v176 = vsub.f32 %v135, %v174
        %v177 = vmul.f32 %v176, %v176
        %v180 = vunpack.c.l.s4 1983009808
        %v181 = vunpack.c.0.s8 %v180
        %v182 = vlaneseq
        %v183 = vshrl.u32 %v182, 7
        %v184 = vsub.s32 %v181, %v183
        %v185 = vrot.slane %v177, %v184
        %v186 = vcombine.high %v185, %v185
        %v189 = vsel %vm147, %v185, 0.0
        %v190 = vrot.slane %v189, 4
        %v191 = vadd.f32 %v189, %v190
        %v192 = vrot.slane %v191, 2
        %v193 = vadd.f32 %v191, %v192
        %v194 = vrot.slane %v193, 1
        %v195 = vadd.f32 %v193, %v194
        %v196 = vsel %vm147, %v186, 0.0
        %v197 = vrot.slane %v196, 4
        %v198 = vadd.f32 %v196, %v197
        %v199 = vrot.slane %v198, 2
        %v200 = vadd.f32 %v198, %v199
        %v201 = vrot.slane %v200, 1
        %v202 = vadd.f32 %v200, %v201
        %v203 = vrsqrt.pop %v195
        %v204 = vmul.f32 %v195, %v203
        %vm205 = vcmp.eq.f32.partialorder %v195, inf
        %v206 = vsel %vm205, %v195, %v204
        %vm207 = vcmp.eq.f32.partialorder %v195, 0.0
        %v208 = vand.u32 %v195, 2147483648
        %v209 = vsel %vm207, %v208, %v206
        %v210 = vrsqrt.pop %v202
        %v211 = vmul.f32 %v202, %v210
        %vm212 = vcmp.eq.f32.partialorder %v202, inf
        %v213 = vsel %vm212, %v202, %v211
        %vm214 = vcmp.eq.f32.partialorder %v202, 0.0
        %v215 = vand.u32 %v202, 2147483648
        %v216 = vsel %vm214, %v215, %v213
        %v217 = vadd.f32 %v209, 1e-05
        %v218 = vadd.f32 %v216, 1e-05
        %v219 = vrcp.pop %v217
        %v220 = vrcp.pop %v218
        %v221 = vmul.f32 %v217, %v219
        %v222 = vmul.f32 %v218, %v220
        %v223 = vsub.f32 2.0, %v221
        %v224 = vsub.f32 2.0, %v222
        %v225 = vmul.f32 %v219, %v223
        %v226 = vmul.f32 %v220, %v224
        %v229 = vcombine.low %v225, %v226
        %v231 = vunpack.c.l.s4 1983009808
        %v232 = vunpack.c.0.s8 %v231
        %v233 = vlaneseq
        %v234 = vshrl.u32 %v233, 7
        %v235 = vsub.s32 %v232, %v234
        %v236 = vrot.slane %v229, %v235
        %v238 = vmul.f32 %v176, %v236
        %239 = vst [vmem:[%s132] sm:$0xf] %v238
        %s240 = sand.u32 %s52, 1
        %s241 = scalar_lea.sflag [#allocation4], %s240
        %s242 = sand.u32 %s52, 1
        %s243 = smul.addr %s242, 4
        %s244 = scalar_lea.vmem [#allocation5], %s243
        // Predicated region
        $region29: #{tpu_custom_call.1} parent=23 // pred_check
          %p245 = pneg %p62
        $region30: #{tpu_custom_call.1} parent=23 // pred_check_branch
          %247 = sbr.rel (%p245) target = $region32
        $region31: #{tpu_custom_call.1} parent=23 // pred_region
          %s248 = smul.u32 2, %s18
          %s250 = ssub.s32 64, 64
          %251 = vsyncadd %s241, %s250
          %s252 = smul.addr %s248, 32
          %s253 = scalar_lea.hbm %s1, %s252
          %s255 = sshll.u32 %s244, 4
          %s256 = int_to_ptr.vmem [resolvable:$true] %s255
          %258 = dma.vmem_to_hbm [thread:$0]  %s256, 64, %s253, %s241
        $region32: #{tpu_custom_call.1} parent=23 // pred_fallthru
          _
      $region24: #{tpu_custom_call.1} parent=5 // pred_fallthru
        _
      %p259 = scmp.le.s32.totalorder 2, %s13
      // Predicated region
      $region33: #{tpu_custom_call.1} parent=5 // pred_check
        %p260 = pneg %p259
      $region34: #{tpu_custom_call.1} parent=5 // pred_check_branch
        %262 = sbr.rel (%p260) target = $region36
      $region35: #{tpu_custom_call.1} parent=5 // pred_region
        %s263 = ssub.s32 %s13, 2
        // Predicated region
        $region37: #{tpu_custom_call.1} parent=35 // pred_check
          %p264 = pneg %p68
        $region38: #{tpu_custom_call.1} parent=35 // pred_check_branch
          %266 = sbr.rel (%p264) target = $region40
        $region39: #{tpu_custom_call.1} parent=35 // pred_region
          %s267 = sand.u32 %s53, 1
          %s268 = scalar_lea.sflag [#allocation4], %s267
          %s269 = sand.u32 %s53, 1
          %s270 = smul.addr %s269, 4
          %s271 = scalar_lea.vmem [#allocation5], %s270
          %272 = dma.done %s268, 64
        $region40: #{tpu_custom_call.1} parent=35 // pred_fallthru
          _
      $region36: #{tpu_custom_call.1} parent=5 // pred_fallthru
        _
    $region6: #{tpu_custom_call.1} parent=1 // loop_footer
      %s17 = sadd.s32 1, %s13
    $region7: #{tpu_custom_call.1} parent=1 // loop_footer_branch
      %12 = sbr.rel target = $region3
    $region8: #{tpu_custom_call.1} parent=1 // loop_exit
      _
    %273 = vsyncpa [#allocation3], 1
    %s274 = scalar_lea.sflag [#allocation3], 1
    %275 = vsyncpa %s274, 1
    %276 = vsyncpa [#allocation4], 1
    %s277 = scalar_lea.sflag [#allocation4], 1
    %278 = vsyncpa %s277, 1

</llo_original>
